<compile_context>
chip_gen: v6e
topology: v6e:2x2x1
jax: 0.10.0
libtpu: 0.0.40
codegen_flags: <defaults>
</compile_context>

<pallas_src>
import jax
import jax.numpy as jnp
from jax.experimental import pallas as pl
from jax.experimental.pallas import tpu as pltpu


def _adapter_kernel(slab_ref, out_ref):
    # Identity passthrough of the fused detection slab (one unmasked,
    # lane-dense copy; out aliases in, so this is effectively a no-op).
    out_ref[...] = slab_ref[...]


def _pack_slab(boxes, labels, scores):
    """Fuse boxes[N,4] f32, labels[N] i32, scores[N] f32 into an (8, Npad) i32 slab."""
    n = boxes.shape[0]
    n_pad = ((n + 127) // 128) * 128  # lane-dense: N on the 128-lane axis

    boxes_i = jax.lax.bitcast_convert_type(boxes, jnp.int32)      # (N, 4) i32
    scores_i = jax.lax.bitcast_convert_type(scores, jnp.int32)    # (N,)   i32
    slab = jnp.concatenate(
        [boxes_i.T,                 # rows 0..3: x1, y1, x2, y2 (bit patterns)
         labels[None, :],           # row 4:     class ids
         scores_i[None, :]],        # row 5:     score bit patterns
        axis=0)                                                   # (6, N) i32
    # Pad sublanes 6->8 and lanes N->n_pad so the block is a whole (8,128) tile
    # multiple: every store is a full, unmasked vst.
    slab = jnp.pad(slab, ((0, 8 - slab.shape[0]), (0, n_pad - n)))
    return slab


def _unpack_slab(slab, n):
    boxes = jax.lax.bitcast_convert_type(slab[0:4, :n].T, jnp.float32)   # (N, 4) f32
    labels = slab[4, :n]                                                 # (N,)   i32
    scores = jax.lax.bitcast_convert_type(slab[5, :n], jnp.float32)      # (N,)   f32
    return boxes, labels, scores


@jax.jit
def _adapter_impl(boxes, labels, scores):
    n = boxes.shape[0]
    slab = _pack_slab(boxes, labels, scores)

    out_slab = pl.pallas_call(
        _adapter_kernel,
        out_shape=jax.ShapeDtypeStruct(slab.shape, slab.dtype),
        in_specs=[pl.BlockSpec(memory_space=pltpu.VMEM)],
        out_specs=pl.BlockSpec(memory_space=pltpu.VMEM),
        # Output aliases the input slab: no fresh HBM allocation / writeback.
        input_output_aliases={0: 0},
    )(slab)

    return _unpack_slab(out_slab, n)


def adapter_forward(x):
    """x: List[Dict[str, jnp.ndarray]] with keys 'boxes', 'labels', 'scores'.

    Returns (boxes, labels, scores) of x[0], matching the PyTorch Adapter.
    """
    det = x[0]
    # TODO(synk): torchvision labels are int64; JAX's default int on TPU is int32
    # (safe for COCO class ids < 91, but a dtype contract change vs. ONNX/PyTorch).
    return _adapter_impl(det["boxes"], det["labels"], det["scores"])


if __name__ == "__main__":
    # Synthetic detection output consistent with a Faster R-CNN head:
    # N detections, each with a box, an integer class label, and a score.
    N = 8
    key = jax.random.PRNGKey(0)
    k_boxes, k_labels, k_scores = jax.random.split(key, 3)

    boxes = jax.random.uniform(k_boxes, (N, 4), dtype=jnp.float32) * 640.0
    labels = jax.random.randint(k_labels, (N,), 0, 91, dtype=jnp.int32)
    scores = jax.random.uniform(k_scores, (N,), dtype=jnp.float32)

    x = [{"boxes": boxes, "labels": labels, "scores": scores}]

    out_boxes, out_labels, out_scores = adapter_forward(x)
    jax.block_until_ready((out_boxes, out_labels, out_scores))

    assert out_boxes.shape == (N, 4) and out_boxes.dtype == jnp.float32
    assert out_labels.shape == (N,) and out_labels.dtype == jnp.int32
    assert out_scores.shape == (N,) and out_scores.dtype == jnp.float32
    assert bool(jnp.all(out_boxes == boxes))
    assert bool(jnp.all(out_labels == labels))
    assert bool(jnp.all(out_scores == scores))

    print("KERNEL_OK")
</pallas_src>

<mosaic_0001>
module attributes {stable_mosaic.version = 11 : i64} {
  func.func @_adapter_kernel(%arg0: memref<8x128xi32, #tpu.memory_space<vmem>>, %arg1: memref<8x128xi32, #tpu.memory_space<vmem>>) attributes {dimension_semantics = [], scalar_prefetch = 0 : i64, scratch_operands = 0 : i64, tpu.core_type = #tpu.core_type<tc>} {
    %c0 = arith.constant 0 : index
    %c0_0 = arith.constant 0 : index
    %0 = vector.load %arg0[%c0, %c0_0] : memref<8x128xi32, #tpu.memory_space<vmem>>, vector<8x128xi32>
    %c0_1 = arith.constant 0 : index
    %c0_2 = arith.constant 0 : index
    %1 = vector.load %arg1[%c0_1, %c0_2] : memref<8x128xi32, #tpu.memory_space<vmem>>, vector<8x128xi32>
    tpu.vector_store %arg1[%c0_1, %c0_2], %0 {strides = array<i32>} : memref<8x128xi32, #tpu.memory_space<vmem>>, vector<8x128xi32>,
    return
  }
}

</mosaic_0001>

<llo_original>
// kernel: _adapter_impl.1
$region0: #{_adapter_impl.1}
  #allocation0 [shape = 'u32[]', space=smem, size = 0x4, offset = 0x4, fixed_abs, tag = 'smem constant byte address 0x4 - core index']
  #allocation1 [shape = 'u32[144,128]{1,0:T(1,128)}', space=vmem, size = 0x12000, scoped, tag = 'internal scratch']
  %s0 = inlined_call_operand.vmem [shape: s32[8,128], index: 0, kind: input, shape index: {}, may-alias: {0,1}]
  %s1 = inlined_call_operand.vmem [shape: s32[8,128], index: 1, kind: output, shape index: {}, may-alias: {0,1}]
  %s2 = sld [smem:[#allocation0]]
  $region14: #{_adapter_impl.1} parent=0
    _
  %s4 = ssub.s32 1, %s2
  %s5 = scalar_select 0, %s4, %s2
  // Predicated region
  $region2: #{_adapter_impl.1} parent=0 // pred_check
    _
  $region3: #{_adapter_impl.1} parent=0 // pred_check_branch
    %7 = sbr.rel (0) target = $region5
  $region4: #{_adapter_impl.1} parent=0 // pred_region
    _
  $region5: #{_adapter_impl.1} parent=0 // pred_fallthru
    _
  %v8 = vld [vmem:[%s0] sm:$0xff]
  %9 = vst [vmem:[%s1] sm:$0xff] %v8
  // Predicated region
  $region6: #{_adapter_impl.1} parent=0 // pred_check
    _
  $region7: #{_adapter_impl.1} parent=0 // pred_check_branch
    %11 = sbr.rel (0) target = $region9
  $region8: #{_adapter_impl.1} parent=0 // pred_region
    _
  $region9: #{_adapter_impl.1} parent=0 // pred_fallthru
    _
  // Predicated region
  $region10: #{_adapter_impl.1} parent=0 // pred_check
    _
  $region11: #{_adapter_impl.1} parent=0 // pred_check_branch
    %13 = sbr.rel (0) target = $region13
  $region12: #{_adapter_impl.1} parent=0 // pred_region
    _
  $region13: #{_adapter_impl.1} parent=0 // pred_fallthru
    _

</llo_original>
